<compile_context>
chip_gen: v7x
topology: tpu7x:2x2x1
jax: 0.10.0
libtpu: 0.0.40
codegen_flags: <defaults>
</compile_context>

<pallas_src>
import jax
import jax.numpy as jnp
from jax.experimental import pallas as pl
from jax.experimental.pallas import tpu as pltpu

_SUBLANE = 8
_LANE = 128


def _round_up(a: int, b: int) -> int:
    return ((a + b - 1) // b) * b


# ---------------------------------------------------------------------------
# Kernels. Output dtype is f32, so we accumulate directly into o_ref (its
# block index is invariant along the K grid axis -> VMEM-resident accumulator).
# ---------------------------------------------------------------------------
def _mm_k1_kernel(x_ref, w_ref, o_ref):
    o_ref[...] = jnp.dot(x_ref[...], w_ref[...],
                         preferred_element_type=jnp.float32)


def _mm_bias_k1_kernel(x_ref, w_ref, b_ref, o_ref):
    o_ref[...] = jnp.dot(x_ref[...], w_ref[...],
                         preferred_element_type=jnp.float32) + b_ref[...]


def _mm_kernel(x_ref, w_ref, o_ref):
    k = pl.program_id(2)

    @pl.when(k == 0)
    def _init():
        o_ref[...] = jnp.zeros_like(o_ref)

    o_ref[...] += jnp.dot(x_ref[...], w_ref[...],
                          preferred_element_type=jnp.float32)


def _mm_bias_kernel(x_ref, w_ref, b_ref, o_ref):
    k = pl.program_id(2)

    @pl.when(k == 0)
    def _init():
        o_ref[...] = jnp.zeros_like(o_ref)

    o_ref[...] += jnp.dot(x_ref[...], w_ref[...],
                          preferred_element_type=jnp.float32)

    @pl.when(k == pl.num_programs(2) - 1)
    def _finalize():
        # Bias is added exactly once, on the final K step.
        o_ref[...] += b_ref[...]


# ---------------------------------------------------------------------------
# Wrapper.
# ---------------------------------------------------------------------------
def linear_regression(x, weights, bias_term=None, *,
                      tm=512, tn=1024, tk=1024,
                      compute_dtype=None,
                      vmem_limit_bytes=48 * 1024 * 1024):
    """Forward pass of LinearRegression: x @ weights (+ bias). Output is f32."""
    M, K = x.shape
    K2, N = weights.shape
    assert K == K2, "inner dimensions must match"

    if compute_dtype is not None:
        # bf16 operands + f32 accumulation: halves HBM bytes, native MXU path.
        x = x.astype(compute_dtype)
        weights = weights.astype(compute_dtype)

    # Clamp tiles: a block dim equal to the full array dim is always legal
    # regardless of (8,128) alignment; otherwise keep the large aligned
    # defaults and let Pallas mask the ragged M/N edge blocks.
    tm = M if M <= tm else tm
    tn = N if N <= tn else tn
    tk = K if K <= tk else tk

    # v7x megacore: if M fits in one block, make sure N splits into >= 2 blocks
    # so both TensorCores get work (no-op on v5e/v6e which have a single TC).
    if M <= tm and tn >= N and N > 2 * _LANE:
        tn = max(_LANE, _round_up((N + 1) // 2, _LANE))

    # Only the reduction axis must be exact: zero-pad K iff it is both larger
    # than the tile and misaligned (zero padding keeps the reduction exact).
    if K > tk and K % tk != 0:
        Kp = _round_up(K, tk)
        x = jnp.pad(x, ((0, 0), (0, Kp - K)))
        weights = jnp.pad(weights, ((0, Kp - K), (0, 0)))
        K = Kp

    grid_m = pl.cdiv(M, tm)
    grid_n = pl.cdiv(N, tn)
    grid_k = K // tk  # exact by construction

    out_shape = jax.ShapeDtypeStruct((M, N), jnp.float32)
    itemsize = x.dtype.itemsize
    cost = pl.CostEstimate(
        flops=2 * M * K * N,
        transcendentals=0,
        # x is re-read once per N block, weights once per M block.
        bytes_accessed=int(itemsize * (M * K * grid_n + K * N * grid_m)
                           + 4 * M * N),
    )

    if bias_term is not None:
        b2d = bias_term.reshape(1, N).astype(jnp.float32)

    if grid_k == 1:
        # Single reduction step: branch-free kernel, 2-D parallel grid.
        grid = (grid_m, grid_n)
        sem = ("parallel", "parallel")
        x_spec = pl.BlockSpec((tm, tk), lambda i, j: (i, 0))
        w_spec = pl.BlockSpec((tk, tn), lambda i, j: (0, j))
        o_spec = pl.BlockSpec((tm, tn), lambda i, j: (i, j))
        if bias_term is not None:
            b_spec = pl.BlockSpec((1, tn), lambda i, j: (0, j))
            kern, in_specs, args = _mm_bias_k1_kernel, [x_spec, w_spec, b_spec], (x, weights, b2d)
        else:
            kern, in_specs, args = _mm_k1_kernel, [x_spec, w_spec], (x, weights)
    else:
        grid = (grid_m, grid_n, grid_k)
        sem = ("parallel", "parallel", "arbitrary")
        x_spec = pl.BlockSpec((tm, tk), lambda i, j, k: (i, k))
        w_spec = pl.BlockSpec((tk, tn), lambda i, j, k: (k, j))
        o_spec = pl.BlockSpec((tm, tn), lambda i, j, k: (i, j))
        if bias_term is not None:
            b_spec = pl.BlockSpec((1, tn), lambda i, j, k: (0, j))
            kern, in_specs, args = _mm_bias_kernel, [x_spec, w_spec, b_spec], (x, weights, b2d)
        else:
            kern, in_specs, args = _mm_kernel, [x_spec, w_spec], (x, weights)

    return pl.pallas_call(
        kern,
        out_shape=out_shape,
        grid_spec=pltpu.PrefetchScalarGridSpec(
            num_scalar_prefetch=0,
            grid=grid,
            in_specs=in_specs,
            out_specs=o_spec,
        ),
        compiler_params=pltpu.CompilerParams(
            dimension_semantics=sem,
            vmem_limit_bytes=vmem_limit_bytes,
        ),
        cost_estimate=cost,
    )(*args)


if __name__ == "__main__":
    key = jax.random.PRNGKey(0)
    kx, kw, kb, kx2, kw2, kb2 = jax.random.split(key, 6)

    # Small shapes consistent with the module: batch=8, in=32, out=16.
    batch, in_features, out_features = 8, 32, 16
    x = jax.random.normal(kx, (batch, in_features), dtype=jnp.float32)
    weights = jax.random.normal(kw, (in_features, out_features), dtype=jnp.float32)
    bias_term = jax.random.normal(kb, (out_features,), dtype=jnp.float32)

    # With bias (single-K-block fast path).
    out = jax.block_until_ready(linear_regression(x, weights, bias_term))
    ref = x @ weights + bias_term
    assert out.shape == (batch, out_features)
    assert jnp.allclose(out, ref, atol=1e-5, rtol=1e-5)

    # Without bias.
    out_nb = jax.block_until_ready(linear_regression(x, weights, None))
    assert jnp.allclose(out_nb, x @ weights, atol=1e-5, rtol=1e-5)

    # Modest multi-tile case: exercises the K-reduction grid, direct o_ref
    # accumulation, masked ragged M/N edge blocks, and bias on the last K step.
    M2, K2, N2 = 200, 384, 272
    x2 = jax.random.normal(kx2, (M2, K2), dtype=jnp.float32)
    w2 = jax.random.normal(kw2, (K2, N2), dtype=jnp.float32)
    b2 = jax.random.normal(kb2, (N2,), dtype=jnp.float32)
    out2 = jax.block_until_ready(
        linear_regression(x2, w2, b2, tm=128, tn=128, tk=128))
    ref2 = jnp.dot(x2, w2, precision=jax.lax.Precision.HIGHEST) + b2
    assert out2.shape == (M2, N2)
    assert jnp.allclose(out2, ref2, atol=2e-3, rtol=2e-3)

    print("KERNEL_OK")
</pallas_src>

<mosaic_0001>
module attributes {stable_mosaic.version = 11 : i64} {
  func.func @_mm_bias_k1_kernel(%arg0: i32, %arg1: i32, %arg2: memref<8x32xf32, #tpu.memory_space<vmem>>, %arg3: memref<32x16xf32, #tpu.memory_space<vmem>>, %arg4: memref<1x16xf32, #tpu.memory_space<vmem>>, %arg5: memref<8x16xf32, #tpu.memory_space<vmem>>) attributes {dimension_semantics = [#tpu.dimension_semantics<parallel>, #tpu.dimension_semantics<parallel>], iteration_bounds = array<i64: 1, 1>, scalar_prefetch = 0 : i64, scratch_operands = 0 : i64, tpu.core_type = #tpu.core_type<tc>, window_params = [{transform_indices = @transform_0, window_bounds = array<i64: 8, 32>}, {transform_indices = @transform_1, window_bounds = array<i64: 32, 16>}, {transform_indices = @transform_2, window_bounds = array<i64: 1, 16>}, {transform_indices = @transform_3, window_bounds = array<i64: 8, 16>}]} {
    %c0 = arith.constant 0 : index
    %c0_0 = arith.constant 0 : index
    %0 = vector.load %arg2[%c0, %c0_0] : memref<8x32xf32, #tpu.memory_space<vmem>>, vector<8x32xf32>
    %c0_1 = arith.constant 0 : index
    %c0_2 = arith.constant 0 : index
    %1 = vector.load %arg3[%c0_1, %c0_2] : memref<32x16xf32, #tpu.memory_space<vmem>>, vector<32x16xf32>
    %cst = arith.constant dense<0.000000e+00> : vector<8x16xf32>
    %2 = tpu.matmul %0, %1, %cst {dimension_numbers = #tpu.dot_dimension_numbers<[1], [0], [0], [1], [0, 0, 1, 1], [], []>} : vector<8x32xf32>, vector<32x16xf32>, vector<8x16xf32> -> vector<8x16xf32>
    %c0_3 = arith.constant 0 : index
    %c0_4 = arith.constant 0 : index
    %3 = vector.load %arg4[%c0_3, %c0_4] : memref<1x16xf32, #tpu.memory_space<vmem>>, vector<1x16xf32>
    %4 = vector.broadcast %3 : vector<1x16xf32> to vector<8x16xf32>
    %5 = arith.addf %2, %4 : vector<8x16xf32>
    %c0_5 = arith.constant 0 : index
    %c0_6 = arith.constant 0 : index
    %6 = vector.load %arg5[%c0_5, %c0_6] : memref<8x16xf32, #tpu.memory_space<vmem>>, vector<8x16xf32>
    tpu.vector_store %arg5[%c0_5, %c0_6], %5 {strides = array<i32>} : memref<8x16xf32, #tpu.memory_space<vmem>>, vector<8x16xf32>,
    return
  }
  func.func @transform_0(%arg0: i32, %arg1: i32) -> (i32, i32) {
    %c0_i32 = arith.constant 0 : i32
    %c0_i32_0 = arith.constant 0 : i32
    return %arg0, %c0_i32 : i32, i32
  }
  func.func @transform_1(%arg0: i32, %arg1: i32) -> (i32, i32) {
    %c0_i32 = arith.constant 0 : i32
    %c0_i32_0 = arith.constant 0 : i32
    return %c0_i32, %arg1 : i32, i32
  }
  func.func @transform_2(%arg0: i32, %arg1: i32) -> (i32, i32) {
    %c0_i32 = arith.constant 0 : i32
    %c0_i32_0 = arith.constant 0 : i32
    return %c0_i32, %arg1 : i32, i32
  }
  func.func @transform_3(%arg0: i32, %arg1: i32) -> (i32, i32) {
    %c0_i32 = arith.constant 0 : i32
    return %arg0, %arg1 : i32, i32
  }
}

</mosaic_0001>

<llo_original>
// kernel: tpu_custom_call.1
$region0: #{tpu_custom_call.1}
  #allocation0 [shape = 'u32[]', space=smem, size = 0x4, offset = 0x4, fixed_abs, tag = 'smem constant byte address 0x4 - core index']
  #allocation1 [shape = 'u32[144,128]{1,0:T(1,128)}', space=vmem, size = 0x12000, scoped, tag = 'internal scratch']
  %s0 = inlined_call_operand.vmem [shape: f32[8,32], index: 0, kind: input, shape index: {}]
  %s1 = inlined_call_operand.vmem [shape: f32[32,16], index: 1, kind: input, shape index: {}]
  %s2 = inlined_call_operand.vmem [shape: f32[1,16], index: 2, kind: input, shape index: {}]
  %s3 = inlined_call_operand.hbm [shape: f32[8,16], index: 3, kind: output, shape index: {}]
  %s4 = sld [smem:[#allocation0]]
  $region22: #{tpu_custom_call.1} parent=0
    _
  %s6 = ssub.s32 1, %s4
  %s7 = scalar_select 0, %s6, %s4
  $region1: #{tpu_custom_call.1} parent=0
    #allocation2 [shape = 'u8[4096]{0}', space=vmem, size = 0x1000, scoped, tag = 'output window, operand 0, single buffered']
    #allocation3 [shape = 's32[1]{0}', space=sflag, size = 0x4, scoped, tag = 'scoped memory for tpu_custom_call.1']
    %8 = vsyncpa [#allocation3], 0
    // Predicated region
    $region2: #{tpu_custom_call.1} parent=1 // pred_check
      _
    $region3: #{tpu_custom_call.1} parent=1 // pred_check_branch
      %10 = sbr.rel (0) target = $region5
    $region4: #{tpu_custom_call.1} parent=1 // pred_region
      _
    $region5: #{tpu_custom_call.1} parent=1 // pred_fallthru
      _
    // Predicated region
    $region6: #{tpu_custom_call.1} parent=1 // pred_check
      _
    $region7: #{tpu_custom_call.1} parent=1 // pred_check_branch
      %12 = sbr.rel (0) target = $region9
    $region8: #{tpu_custom_call.1} parent=1 // pred_region
      _
    $region9: #{tpu_custom_call.1} parent=1 // pred_fallthru
      _
    // Predicated region
    $region10: #{tpu_custom_call.1} parent=1 // pred_check
      _
    $region11: #{tpu_custom_call.1} parent=1 // pred_check_branch
      %14 = sbr.rel (0) target = $region13
    $region12: #{tpu_custom_call.1} parent=1 // pred_region
      _
    $region13: #{tpu_custom_call.1} parent=1 // pred_fallthru
      _
    %v15 = vld [vmem:[%s0] sm:$0xff]
    %v16 = vld [vmem:[%s1] sm:$0xff]
    %v17 = vld [vmem:[%s1 + $0x8] sm:$0xff]
    %v18 = vld [vmem:[%s1 + $0x10] sm:$0xff]
    %v19 = vld [vmem:[%s1 + $0x18] sm:$0xff]
    %v20 = vld [vmem:[%s2] sm:$0x1]
    %v22 = vlaneseq
    %v23 = vshrl.u32 %v22, 7
    %v24 = vsub.s32 0, %v23
    %v25 = vrot.slane %v20, %v24
    %vm27 = vcmask 261120
    %v29 = vsel %vm27, %v15, 0
    %31 = vmatprep.subr.mxu0 0.0
    %32 = vmatpush1.msra.mxu0 %v16
    %33 = vmatprep.subr.mxu0 0.0
    %34 = vmatpush1.msra.mxu0 %v17
    %35 = vmatprep.subr.mxu0 0.0
    %36 = vmatpush1.msra.mxu0 %v18
    %37 = vmatprep.subr.mxu0 0.0
    %38 = vmatpush1.msra.mxu0 %v19
    %39 = vmatprep.subr.mxu0 0.0
    %40 = vmatpush1.msra.mxu0 0.0
    %41 = vmatprep.subr.mxu0 0.0
    %42 = vmatpush1.msra.mxu0 0.0
    %43 = vmatprep.subr.mxu0 0.0
    %44 = vmatpush1.msra.mxu0 0.0
    %45 = vmatprep.subr.mxu0 0.0
    %46 = vmatpush1.msra.mxu0 0.0
    %47 = vmatprep.subr.mxu0 0.0
    %48 = vmatpush1.msra.mxu0 0.0
    %49 = vmatprep.subr.mxu0 0.0
    %50 = vmatpush1.msra.mxu0 0.0
    %51 = vmatprep.subr.mxu0 0.0
    %52 = vmatpush1.msra.mxu0 0.0
    %53 = vmatprep.subr.mxu0 0.0
    %54 = vmatpush1.msra.mxu0 0.0
    %55 = vmatprep.subr.mxu0 0.0
    %56 = vmatpush1.msra.mxu0 0.0
    %57 = vmatprep.subr.mxu0 0.0
    %58 = vmatpush1.msra.mxu0 0.0
    %59 = vmatprep.subr.mxu0 0.0
    %60 = vmatpush1.msra.mxu0 0.0
    %61 = vmatprep.subr.mxu0 0.0
    %62 = vmatpush1.msra.mxu0 0.0
    %63 = vmatprep.subr.mxu0 0.0
    %64 = vmatpush1.msra.mxu0 0.0
    %65 = vmatprep.subr.mxu0 0.0
    %66 = vmatpush1.msra.mxu0 0.0
    %67 = vmatprep.subr.mxu0 0.0
    %68 = vmatpush1.msra.mxu0 0.0
    %69 = vmatprep.subr.mxu0 0.0
    %70 = vmatpush1.msra.mxu0 0.0
    %71 = vmatprep.subr.mxu0 0.0
    %72 = vmatpush1.msra.mxu0 0.0
    %73 = vmatprep.subr.mxu0 0.0
    %74 = vmatpush1.msra.mxu0 0.0
    %75 = vmatprep.subr.mxu0 0.0
    %76 = vmatpush1.msra.mxu0 0.0
    %77 = vmatprep.subr.mxu0 0.0
    %78 = vmatpush1.msra.mxu0 0.0
    %79 = vmatprep.subr.mxu0 0.0
    %80 = vmatpush1.msra.mxu0 0.0
    %81 = vmatprep.subr.mxu0 0.0
    %82 = vmatpush1.msra.mxu0 0.0
    %83 = vmatprep.subr.mxu0 0.0
    %84 = vmatpush1.msra.mxu0 0.0
    %85 = vmatprep.subr.mxu0 0.0
    %86 = vmatpush1.msra.mxu0 0.0
    %87 = vmatprep.subr.mxu0 0.0
    %88 = vmatpush1.msra.mxu0 0.0
    %89 = vmatprep.subr.mxu0 0.0
    %90 = vmatpush1.msra.mxu0 0.0
    %91 = vmatprep.subr.mxu0 0.0
    %92 = vmatpush1.msra.mxu0 0.0
    %93 = vmatprep.subr.mxu0 0.0
    %94 = vmatpush1.msra.mxu0 0.0
    %95 = vmatprep.mubr.f32.mxu0 0.0
    %96 = vmatmul.mubr.f32.gmra.mrb[0].mxu0 %v29
    %v97 = vpop.f32.mrb[0].mxu0
    %v98 = vadd.f32 %v25, %v97
    %v99 = vpop.f32.mrb[0].mxu0
    %100 = vdwg.mxu0
    %vm101 = vcmask 130048
    %102 = vst.msk [vmem:[#allocation2] sm:$0xff] %vm101, %v98
    // Predicated region
    $region14: #{tpu_custom_call.1} parent=1 // pred_check
      _
    $region15: #{tpu_custom_call.1} parent=1 // pred_check_branch
      %104 = sbr.rel (0) target = $region17
    $region16: #{tpu_custom_call.1} parent=1 // pred_region
      %s106 = ssub.s32 128, 128
      %107 = vsyncadd [#allocation3], %s106
      %s109 = sshll.u32 [#allocation2], 4
      %s110 = int_to_ptr.vmem [resolvable:$true] %s109
      %112 = dma.vmem_to_hbm [thread:$0]  %s110, 128, %s3, [#allocation3]
    $region17: #{tpu_custom_call.1} parent=1 // pred_fallthru
      _
    // Predicated region
    $region18: #{tpu_custom_call.1} parent=1 // pred_check
      _
    $region19: #{tpu_custom_call.1} parent=1 // pred_check_branch
      %114 = sbr.rel (0) target = $region21
    $region20: #{tpu_custom_call.1} parent=1 // pred_region
      %115 = dma.done [#allocation3], 128
    $region21: #{tpu_custom_call.1} parent=1 // pred_fallthru
      _
    %116 = vsyncpa [#allocation3], 1

</llo_original>
